<compile_context>
chip_gen: v7x
topology: tpu7x:2x2x1
jax: 0.10.0
libtpu: 0.0.40
codegen_flags: <defaults>
</compile_context>

<pallas_src>
import functools

import jax
import jax.numpy as jnp
from jax.experimental import pallas as pl
from jax.experimental.pallas import tpu as pltpu


def _round_up(x, m):
    return ((x + m - 1) // m) * m


def _mlp_kernel(x_ref, w1_ref, b1_ref, w2_ref, b2_ref, w3_ref, b3_ref, o_ref):
    # fc1 + ReLU  (bf16 x bf16 -> f32 accumulation on the MXU)
    h1 = jnp.dot(x_ref[...], w1_ref[...], preferred_element_type=jnp.float32)
    h1 = jnp.maximum(h1 + b1_ref[...], 0.0)
    # fc2 + ReLU
    h2 = jnp.dot(h1.astype(w2_ref.dtype), w2_ref[...],
                 preferred_element_type=jnp.float32)
    h2 = jnp.maximum(h2 + b2_ref[...], 0.0)
    # fc3 (logits, no activation)
    out = jnp.dot(h2.astype(w3_ref.dtype), w3_ref[...],
                  preferred_element_type=jnp.float32)
    o_ref[...] = (out + b3_ref[...]).astype(o_ref.dtype)


def net_forward(x, params, *, tile_b=256, compute_dtype=jnp.bfloat16):
    """x: [B, size] float32. params: dict of fc{1,2,3} weight/bias (PyTorch layout)."""
    B, size = x.shape

    # PyTorch Linear weight layout is (out, in); transpose to (in, out).
    w1 = params["fc1_w"].T
    w2 = params["fc2_w"].T
    w3 = params["fc3_w"].T
    b1 = params["fc1_b"]
    b2 = params["fc2_b"]
    b3 = params["fc3_b"]

    h1_dim = w1.shape[1]
    h2_dim = w2.shape[1]
    out_dim = w3.shape[1]

    # Lane-align every feature dim to a multiple of 128.  Zero padding preserves
    # semantics: padded input columns are 0, padded hidden units have zero
    # weights & bias (relu(0) = 0), padded output columns are sliced off below.
    in_pad = _round_up(size, 128)
    h1_pad = _round_up(h1_dim, 128)
    h2_pad = _round_up(h2_dim, 128)
    out_pad = _round_up(out_dim, 128)

    # Batch tiling: tile is a multiple of the sublane/packing granule; the batch
    # is padded to a multiple of the tile and the result sliced back.  Small
    # batches collapse to a single grid step.
    granule = 16 if compute_dtype == jnp.bfloat16 else 8
    b_tile = min(_round_up(tile_b, granule), _round_up(B, granule))
    B_pad = _round_up(B, b_tile)
    grid = (B_pad // b_tile,)

    def pad2(a, rows, cols):
        return jnp.pad(a, ((0, rows - a.shape[0]), (0, cols - a.shape[1])))

    x_p = pad2(x, B_pad, in_pad).astype(compute_dtype)
    w1_p = pad2(w1, in_pad, h1_pad).astype(compute_dtype)
    w2_p = pad2(w2, h1_pad, h2_pad).astype(compute_dtype)
    w3_p = pad2(w3, h2_pad, out_pad).astype(compute_dtype)
    # Biases stay f32: added directly to the f32 MXU accumulator.
    b1_p = jnp.pad(b1, (0, h1_pad - h1_dim)).reshape(1, -1).astype(jnp.float32)
    b2_p = jnp.pad(b2, (0, h2_pad - h2_dim)).reshape(1, -1).astype(jnp.float32)
    b3_p = jnp.pad(b3, (0, out_pad - out_dim)).reshape(1, -1).astype(jnp.float32)

    # TODO(synk): weights/biases are grid-invariant; with long batch grids,
    # pipeline_mode=pl.Buffered(1) on their BlockSpecs would halve their VMEM
    # residency (left at the default here for maximal lowering compatibility).
    out = pl.pallas_call(
        _mlp_kernel,
        out_shape=jax.ShapeDtypeStruct((B_pad, out_pad), jnp.float32),
        grid_spec=pltpu.PrefetchScalarGridSpec(
            num_scalar_prefetch=0,
            grid=grid,
            in_specs=[
                pl.BlockSpec((b_tile, in_pad), lambda i: (i, 0)),   # x tile
                pl.BlockSpec((in_pad, h1_pad), lambda i: (0, 0)),   # w1 (full)
                pl.BlockSpec((1, h1_pad), lambda i: (0, 0)),        # b1
                pl.BlockSpec((h1_pad, h2_pad), lambda i: (0, 0)),   # w2
                pl.BlockSpec((1, h2_pad), lambda i: (0, 0)),        # b2
                pl.BlockSpec((h2_pad, out_pad), lambda i: (0, 0)),  # w3
                pl.BlockSpec((1, out_pad), lambda i: (0, 0)),       # b3
            ],
            out_specs=pl.BlockSpec((b_tile, out_pad), lambda i: (i, 0)),
        ),
        compiler_params=pltpu.CompilerParams(
            dimension_semantics=("parallel",),
        ),
    )(x_p, w1_p, b1_p, w2_p, b2_p, w3_p, b3_p)

    return out[:B, :out_dim]


def init_params(key, size):
    """Deterministic synthetic params matching nn.Linear shapes for size < 700."""
    ks = jax.random.split(key, 6)

    def uni(k, shape, fan_in):
        bound = 1.0 / jnp.sqrt(fan_in)
        return jax.random.uniform(k, shape, jnp.float32, -bound, bound)

    return {
        "fc1_w": uni(ks[0], (size, size), size),
        "fc1_b": uni(ks[1], (size,), size),
        "fc2_w": uni(ks[2], (size, size), size),
        "fc2_b": uni(ks[3], (size,), size),
        "fc3_w": uni(ks[4], (2, size), size),
        "fc3_b": uni(ks[5], (2,), size),
    }


def net_forward_ref(x, params):
    """Plain-JAX f32 reference mirroring the PyTorch forward."""
    h = jnp.maximum(x @ params["fc1_w"].T + params["fc1_b"], 0.0)
    h = jnp.maximum(h @ params["fc2_w"].T + params["fc2_b"], 0.0)
    return h @ params["fc3_w"].T + params["fc3_b"]


if __name__ == "__main__":
    size = 32   # feature size (< 700 branch of Net.__init__)
    batch = 8

    key = jax.random.PRNGKey(0)
    k_x, k_p = jax.random.split(key)
    x = jax.random.normal(k_x, (batch, size), jnp.float32)
    params = init_params(k_p, size)

    fwd = jax.jit(net_forward)
    out = jax.block_until_ready(fwd(x, params))

    ref = net_forward_ref(x, params)
    assert out.shape == (batch, 2)
    # bf16 inputs/weights with f32 accumulation -> relaxed tolerance vs f32 ref.
    assert jnp.allclose(out, ref, atol=5e-2, rtol=5e-2), "mismatch vs reference"

    print("KERNEL_OK")
</pallas_src>

<mosaic_0001>
module attributes {stable_mosaic.version = 11 : i64} {
  func.func @_mlp_kernel(%arg0: i32, %arg1: memref<16x128xbf16, #tpu.memory_space<vmem>>, %arg2: memref<128x128xbf16, #tpu.memory_space<vmem>>, %arg3: memref<1x128xf32, #tpu.memory_space<vmem>>, %arg4: memref<128x128xbf16, #tpu.memory_space<vmem>>, %arg5: memref<1x128xf32, #tpu.memory_space<vmem>>, %arg6: memref<128x128xbf16, #tpu.memory_space<vmem>>, %arg7: memref<1x128xf32, #tpu.memory_space<vmem>>, %arg8: memref<16x128xf32, #tpu.memory_space<vmem>>) attributes {dimension_semantics = [#tpu.dimension_semantics<parallel>], iteration_bounds = array<i64: 1>, scalar_prefetch = 0 : i64, scratch_operands = 0 : i64, tpu.core_type = #tpu.core_type<tc>, window_params = [{transform_indices = @transform_0, window_bounds = array<i64: 16, 128>}, {pipeline_mode = #tpu.pipeline_mode<synchronous>, transform_indices = @transform_1, window_bounds = array<i64: 128, 128>}, {pipeline_mode = #tpu.pipeline_mode<synchronous>, transform_indices = @transform_2, window_bounds = array<i64: 1, 128>}, {pipeline_mode = #tpu.pipeline_mode<synchronous>, transform_indices = @transform_3, window_bounds = array<i64: 128, 128>}, {pipeline_mode = #tpu.pipeline_mode<synchronous>, transform_indices = @transform_4, window_bounds = array<i64: 1, 128>}, {pipeline_mode = #tpu.pipeline_mode<synchronous>, transform_indices = @transform_5, window_bounds = array<i64: 128, 128>}, {pipeline_mode = #tpu.pipeline_mode<synchronous>, transform_indices = @transform_6, window_bounds = array<i64: 1, 128>}, {transform_indices = @transform_7, window_bounds = array<i64: 16, 128>}]} {
    %c0 = arith.constant 0 : index
    %c0_0 = arith.constant 0 : index
    %0 = vector.load %arg1[%c0, %c0_0] : memref<16x128xbf16, #tpu.memory_space<vmem>>, vector<16x128xbf16>
    %c0_1 = arith.constant 0 : index
    %c0_2 = arith.constant 0 : index
    %1 = vector.load %arg2[%c0_1, %c0_2] : memref<128x128xbf16, #tpu.memory_space<vmem>>, vector<128x128xbf16>
    %cst = arith.constant dense<0.000000e+00> : vector<16x128xf32>
    %2 = tpu.matmul %0, %1, %cst {dimension_numbers = #tpu.dot_dimension_numbers<[1], [0], [0], [1], [0, 0, 1, 1], [], []>} : vector<16x128xbf16>, vector<128x128xbf16>, vector<16x128xf32> -> vector<16x128xf32>
    %c0_3 = arith.constant 0 : index
    %c0_4 = arith.constant 0 : index
    %3 = vector.load %arg3[%c0_3, %c0_4] : memref<1x128xf32, #tpu.memory_space<vmem>>, vector<1x128xf32>
    %4 = vector.broadcast %3 : vector<1x128xf32> to vector<16x128xf32>
    %5 = arith.addf %2, %4 : vector<16x128xf32>
    %cst_5 = arith.constant 0.000000e+00 : f32
    %6 = vector.broadcast %cst_5 : f32 to vector<16x128xf32>
    %7 = arith.maximumf %5, %6 : vector<16x128xf32>
    %8 = arith.truncf %7 : vector<16x128xf32> to vector<16x128xbf16>
    %c0_6 = arith.constant 0 : index
    %c0_7 = arith.constant 0 : index
    %9 = vector.load %arg4[%c0_6, %c0_7] : memref<128x128xbf16, #tpu.memory_space<vmem>>, vector<128x128xbf16>
    %cst_8 = arith.constant dense<0.000000e+00> : vector<16x128xf32>
    %10 = tpu.matmul %8, %9, %cst_8 {dimension_numbers = #tpu.dot_dimension_numbers<[1], [0], [0], [1], [0, 0, 1, 1], [], []>} : vector<16x128xbf16>, vector<128x128xbf16>, vector<16x128xf32> -> vector<16x128xf32>
    %c0_9 = arith.constant 0 : index
    %c0_10 = arith.constant 0 : index
    %11 = vector.load %arg5[%c0_9, %c0_10] : memref<1x128xf32, #tpu.memory_space<vmem>>, vector<1x128xf32>
    %12 = vector.broadcast %11 : vector<1x128xf32> to vector<16x128xf32>
    %13 = arith.addf %10, %12 : vector<16x128xf32>
    %cst_11 = arith.constant 0.000000e+00 : f32
    %14 = vector.broadcast %cst_11 : f32 to vector<16x128xf32>
    %15 = arith.maximumf %13, %14 : vector<16x128xf32>
    %16 = arith.truncf %15 : vector<16x128xf32> to vector<16x128xbf16>
    %c0_12 = arith.constant 0 : index
    %c0_13 = arith.constant 0 : index
    %17 = vector.load %arg6[%c0_12, %c0_13] : memref<128x128xbf16, #tpu.memory_space<vmem>>, vector<128x128xbf16>
    %cst_14 = arith.constant dense<0.000000e+00> : vector<16x128xf32>
    %18 = tpu.matmul %16, %17, %cst_14 {dimension_numbers = #tpu.dot_dimension_numbers<[1], [0], [0], [1], [0, 0, 1, 1], [], []>} : vector<16x128xbf16>, vector<128x128xbf16>, vector<16x128xf32> -> vector<16x128xf32>
    %c0_15 = arith.constant 0 : index
    %c0_16 = arith.constant 0 : index
    %19 = vector.load %arg7[%c0_15, %c0_16] : memref<1x128xf32, #tpu.memory_space<vmem>>, vector<1x128xf32>
    %20 = vector.broadcast %19 : vector<1x128xf32> to vector<16x128xf32>
    %21 = arith.addf %18, %20 : vector<16x128xf32>
    %c0_17 = arith.constant 0 : index
    %c0_18 = arith.constant 0 : index
    %22 = vector.load %arg8[%c0_17, %c0_18] : memref<16x128xf32, #tpu.memory_space<vmem>>, vector<16x128xf32>
    tpu.vector_store %arg8[%c0_17, %c0_18], %21 {strides = array<i32>} : memref<16x128xf32, #tpu.memory_space<vmem>>, vector<16x128xf32>,
    return
  }
  func.func @transform_0(%arg0: i32) -> (i32, i32) {
    %c0_i32 = arith.constant 0 : i32
    %c0_i32_0 = arith.constant 0 : i32
    return %arg0, %c0_i32 : i32, i32
  }
  func.func @transform_1(%arg0: i32) -> (i32, i32) {
    %c0_i32 = arith.constant 0 : i32
    %c0_i32_0 = arith.constant 0 : i32
    %c0_i32_1 = arith.constant 0 : i32
    return %c0_i32, %c0_i32_0 : i32, i32
  }
  func.func @transform_2(%arg0: i32) -> (i32, i32) {
    %c0_i32 = arith.constant 0 : i32
    %c0_i32_0 = arith.constant 0 : i32
    %c0_i32_1 = arith.constant 0 : i32
    return %c0_i32, %c0_i32_0 : i32, i32
  }
  func.func @transform_3(%arg0: i32) -> (i32, i32) {
    %c0_i32 = arith.constant 0 : i32
    %c0_i32_0 = arith.constant 0 : i32
    %c0_i32_1 = arith.constant 0 : i32
    return %c0_i32, %c0_i32_0 : i32, i32
  }
  func.func @transform_4(%arg0: i32) -> (i32, i32) {
    %c0_i32 = arith.constant 0 : i32
    %c0_i32_0 = arith.constant 0 : i32
    %c0_i32_1 = arith.constant 0 : i32
    return %c0_i32, %c0_i32_0 : i32, i32
  }
  func.func @transform_5(%arg0: i32) -> (i32, i32) {
    %c0_i32 = arith.constant 0 : i32
    %c0_i32_0 = arith.constant 0 : i32
    %c0_i32_1 = arith.constant 0 : i32
    return %c0_i32, %c0_i32_0 : i32, i32
  }
  func.func @transform_6(%arg0: i32) -> (i32, i32) {
    %c0_i32 = arith.constant 0 : i32
    %c0_i32_0 = arith.constant 0 : i32
    %c0_i32_1 = arith.constant 0 : i32
    return %c0_i32, %c0_i32_0 : i32, i32
  }
  func.func @transform_7(%arg0: i32) -> (i32, i32) {
    %c0_i32 = arith.constant 0 : i32
    %c0_i32_0 = arith.constant 0 : i32
    return %arg0, %c0_i32 : i32, i32
  }
}

</mosaic_0001>

<llo_original>
// kernel: net_forward.1
$region0: #{net_forward.1}
  #allocation0 [shape = 'u32[]', space=smem, size = 0x4, offset = 0x4, fixed_abs, tag = 'smem constant byte address 0x4 - core index']
  #allocation1 [shape = 'u32[144,128]{1,0:T(1,128)}', space=vmem, size = 0x12000, scoped, tag = 'internal scratch']
  %s0 = inlined_call_operand.vmem [shape: bf16[16,128], index: 0, kind: input, shape index: {}]
  %s1 = inlined_call_operand.vmem [shape: bf16[128,128], index: 1, kind: input, shape index: {}]
  %s2 = inlined_call_operand.vmem [shape: f32[1,128], index: 2, kind: input, shape index: {}]
  %s3 = inlined_call_operand.vmem [shape: bf16[128,128], index: 3, kind: input, shape index: {}]
  %s4 = inlined_call_operand.vmem [shape: f32[1,128], index: 4, kind: input, shape index: {}]
  %s5 = inlined_call_operand.vmem [shape: bf16[128,128], index: 5, kind: input, shape index: {}]
  %s6 = inlined_call_operand.vmem [shape: f32[1,128], index: 6, kind: input, shape index: {}]
  %s7 = inlined_call_operand.vmem [shape: f32[16,128], index: 7, kind: output, shape index: {}]
  %s8 = sld [smem:[#allocation0]]
  $region38: #{net_forward.1} parent=0
    _
  %s10 = ssub.s32 1, %s8
  %s11 = scalar_select 0, %s10, %s8
  // Predicated region
  $region2: #{net_forward.1} parent=0 // pred_check
    _
  $region3: #{net_forward.1} parent=0 // pred_check_branch
    %13 = sbr.rel (0) target = $region5
  $region4: #{net_forward.1} parent=0 // pred_region
    _
  $region5: #{net_forward.1} parent=0 // pred_fallthru
    _
  // Predicated region
  $region6: #{net_forward.1} parent=0 // pred_check
    _
  $region7: #{net_forward.1} parent=0 // pred_check_branch
    %15 = sbr.rel (0) target = $region9
  $region8: #{net_forward.1} parent=0 // pred_region
    _
  $region9: #{net_forward.1} parent=0 // pred_fallthru
    _
  // Predicated region
  $region10: #{net_forward.1} parent=0 // pred_check
    _
  $region11: #{net_forward.1} parent=0 // pred_check_branch
    %17 = sbr.rel (0) target = $region13
  $region12: #{net_forward.1} parent=0 // pred_region
    _
  $region13: #{net_forward.1} parent=0 // pred_fallthru
    _
  // Predicated region
  $region14: #{net_forward.1} parent=0 // pred_check
    _
  $region15: #{net_forward.1} parent=0 // pred_check_branch
    %19 = sbr.rel (0) target = $region17
  $region16: #{net_forward.1} parent=0 // pred_region
    _
  $region17: #{net_forward.1} parent=0 // pred_fallthru
    _
  // Predicated region
  $region18: #{net_forward.1} parent=0 // pred_check
    _
  $region19: #{net_forward.1} parent=0 // pred_check_branch
    %21 = sbr.rel (0) target = $region21
  $region20: #{net_forward.1} parent=0 // pred_region
    _
  $region21: #{net_forward.1} parent=0 // pred_fallthru
    _
  // Predicated region
  $region22: #{net_forward.1} parent=0 // pred_check
    _
  $region23: #{net_forward.1} parent=0 // pred_check_branch
    %23 = sbr.rel (0) target = $region25
  $region24: #{net_forward.1} parent=0 // pred_region
    _
  $region25: #{net_forward.1} parent=0 // pred_fallthru
    _
  // Predicated region
  $region26: #{net_forward.1} parent=0 // pred_check
    _
  $region27: #{net_forward.1} parent=0 // pred_check_branch
    %25 = sbr.rel (0) target = $region29
  $region28: #{net_forward.1} parent=0 // pred_region
    _
  $region29: #{net_forward.1} parent=0 // pred_fallthru
    _
  %v27 = vld [vmem:[%s0] sm:$0xf]
  %v28 = vld [vmem:[%s0 + $0x4] sm:$0xf]
  %v29 = vld [vmem:[%s1] sm:$0xf]
  %v30 = vld [vmem:[%s1 + $0x4] sm:$0xf]
  %v31 = vld [vmem:[%s1 + $0x8] sm:$0xf]
  %v32 = vld [vmem:[%s1 + $0xc] sm:$0xf]
  %v33 = vld [vmem:[%s1 + $0x10] sm:$0xf]
  %v34 = vld [vmem:[%s1 + $0x14] sm:$0xf]
  %v35 = vld [vmem:[%s1 + $0x18] sm:$0xf]
  %v36 = vld [vmem:[%s1 + $0x1c] sm:$0xf]
  %v37 = vld [vmem:[%s1 + $0x20] sm:$0xf]
  %v38 = vld [vmem:[%s1 + $0x24] sm:$0xf]
  %v39 = vld [vmem:[%s1 + $0x28] sm:$0xf]
  %v40 = vld [vmem:[%s1 + $0x2c] sm:$0xf]
  %v41 = vld [vmem:[%s1 + $0x30] sm:$0xf]
  %v42 = vld [vmem:[%s1 + $0x34] sm:$0xf]
  %v43 = vld [vmem:[%s1 + $0x38] sm:$0xf]
  %v44 = vld [vmem:[%s1 + $0x3c] sm:$0xf]
  %v45 = vld [vmem:[%s2] sm:$0x1]
  %v47 = vlaneseq
  %v48 = vshrl.u32 %v47, 7
  %v49 = vsub.s32 0, %v48
  %v50 = vrot.slane %v45, %v49
  %v54 = vunpack.c.l.b16 %v27
  %v55 = vunpack.c.l.b16 %v28
  %v56 = vpack.c.b16 %v55, %v54
  %v74 = vunpack.c.l.b16 %v29
  %v75 = vunpack.c.l.b16 %v30
  %v76 = vunpack.c.l.b16 %v31
  %v77 = vunpack.c.l.b16 %v32
  %v78 = vunpack.c.l.b16 %v33
  %v79 = vunpack.c.l.b16 %v34
  %v80 = vunpack.c.l.b16 %v35
  %v81 = vunpack.c.l.b16 %v36
  %v82 = vunpack.c.l.b16 %v37
  %v83 = vunpack.c.l.b16 %v38
  %v84 = vunpack.c.l.b16 %v39
  %v85 = vunpack.c.l.b16 %v40
  %v86 = vunpack.c.l.b16 %v41
  %v87 = vunpack.c.l.b16 %v42
  %v88 = vunpack.c.l.b16 %v43
  %v89 = vunpack.c.l.b16 %v44
  %v90 = vpack.c.b16 %v75, %v74
  %v91 = vpack.c.b16 %v77, %v76
  %v92 = vpack.c.b16 %v79, %v78
  %v93 = vpack.c.b16 %v81, %v80
  %v94 = vpack.c.b16 %v83, %v82
  %v95 = vpack.c.b16 %v85, %v84
  %v96 = vpack.c.b16 %v87, %v86
  %v97 = vpack.c.b16 %v89, %v88
  %106 = vmatprep.subr.bf16.mxu0 0
  %107 = vmatpush1.bf16.msra.mxu0 %v90
  %108 = vmatprep.subr.bf16.mxu0 0
  %109 = vmatpush1.bf16.msra.mxu0 %v91
  %110 = vmatprep.subr.bf16.mxu0 0
  %111 = vmatpush1.bf16.msra.mxu0 %v92
  %112 = vmatprep.subr.bf16.mxu0 0
  %113 = vmatpush1.bf16.msra.mxu0 %v93
  %114 = vmatprep.subr.bf16.mxu0 0
  %115 = vmatpush1.bf16.msra.mxu0 %v94
  %116 = vmatprep.subr.bf16.mxu0 0
  %117 = vmatpush1.bf16.msra.mxu0 %v95
  %118 = vmatprep.subr.bf16.mxu0 0
  %119 = vmatpush1.bf16.msra.mxu0 %v96
  %120 = vmatprep.subr.bf16.mxu0 0
  %121 = vmatpush1.bf16.msra.mxu0 %v97
  %122 = vmatprep.subr.bf16.mxu0 0
  %123 = vmatpush1.bf16.msra.mxu0 0
  %124 = vmatprep.subr.bf16.mxu0 0
  %125 = vmatpush1.bf16.msra.mxu0 0
  %126 = vmatprep.subr.bf16.mxu0 0
  %127 = vmatpush1.bf16.msra.mxu0 0
  %128 = vmatprep.subr.bf16.mxu0 0
  %129 = vmatpush1.bf16.msra.mxu0 0
  %130 = vmatprep.subr.bf16.mxu0 0
  %131 = vmatpush1.bf16.msra.mxu0 0
  %132 = vmatprep.subr.bf16.mxu0 0
  %133 = vmatpush1.bf16.msra.mxu0 0
  %134 = vmatprep.subr.bf16.mxu0 0
  %135 = vmatpush1.bf16.msra.mxu0 0
  %136 = vmatprep.subr.bf16.mxu0 0
  %137 = vmatpush1.bf16.msra.mxu0 0
  %138 = vmatprep.mubr.bf16.mxu0 0
  %139 = vmatmul.mubr.bf16.gmra.mrb[0].mxu0 %v56
  %v140 = vpop.f32.mrb[0].mxu0
  %v141 = vadd.f32 %v50, %v140
  %v142 = vpop.f32.mrb[0].mxu0
  %v143 = vpop.f32.mrb[0].mxu0
  %v144 = vadd.f32 %v50, %v143
  %v145 = vpop.f32.mrb[0].mxu0
  %146 = vdwg.mxu0
  %v147 = vmax.f32 %v141, 0.0
  %v148 = vmax.f32 %v144, 0.0
  %v149 = vpack.c.bf16 %v148, %v147
  %v150 = vld [vmem:[%s3] sm:$0xf]
  %v151 = vld [vmem:[%s3 + $0x4] sm:$0xf]
  %v152 = vld [vmem:[%s3 + $0x8] sm:$0xf]
  %v153 = vld [vmem:[%s3 + $0xc] sm:$0xf]
  %v154 = vld [vmem:[%s3 + $0x10] sm:$0xf]
  %v155 = vld [vmem:[%s3 + $0x14] sm:$0xf]
  %v156 = vld [vmem:[%s3 + $0x18] sm:$0xf]
  %v157 = vld [vmem:[%s3 + $0x1c] sm:$0xf]
  %v158 = vld [vmem:[%s3 + $0x20] sm:$0xf]
  %v159 = vld [vmem:[%s3 + $0x24] sm:$0xf]
  %v160 = vld [vmem:[%s3 + $0x28] sm:$0xf]
  %v161 = vld [vmem:[%s3 + $0x2c] sm:$0xf]
  %v162 = vld [vmem:[%s3 + $0x30] sm:$0xf]
  %v163 = vld [vmem:[%s3 + $0x34] sm:$0xf]
  %v164 = vld [vmem:[%s3 + $0x38] sm:$0xf]
  %v165 = vld [vmem:[%s3 + $0x3c] sm:$0xf]
  %v166 = vld [vmem:[%s4] sm:$0x1]
  %v168 = vlaneseq
  %v169 = vshrl.u32 %v168, 7
  %v170 = vsub.s32 0, %v169
  %v171 = vrot.slane %v166, %v170
  %v189 = vunpack.c.l.b16 %v150
  %v190 = vunpack.c.l.b16 %v151
  %v191 = vunpack.c.l.b16 %v152
  %v192 = vunpack.c.l.b16 %v153
  %v193 = vunpack.c.l.b16 %v154
  %v194 = vunpack.c.l.b16 %v155
  %v195 = vunpack.c.l.b16 %v156
  %v196 = vunpack.c.l.b16 %v157
  %v197 = vunpack.c.l.b16 %v158
  %v198 = vunpack.c.l.b16 %v159
  %v199 = vunpack.c.l.b16 %v160
  %v200 = vunpack.c.l.b16 %v161
  %v201 = vunpack.c.l.b16 %v162
  %v202 = vunpack.c.l.b16 %v163
  %v203 = vunpack.c.l.b16 %v164
  %v204 = vunpack.c.l.b16 %v165
  %v205 = vpack.c.b16 %v190, %v189
  %v206 = vpack.c.b16 %v192, %v191
  %v207 = vpack.c.b16 %v194, %v193
  %v208 = vpack.c.b16 %v196, %v195
  %v209 = vpack.c.b16 %v198, %v197
  %v210 = vpack.c.b16 %v200, %v199
  %v211 = vpack.c.b16 %v202, %v201
  %v212 = vpack.c.b16 %v204, %v203
  %221 = vmatprep.subr.bf16.mxu0 0
  %222 = vmatpush1.bf16.msra.mxu0 %v205
  %223 = vmatprep.subr.bf16.mxu0 0
  %224 = vmatpush1.bf16.msra.mxu0 %v206
  %225 = vmatprep.subr.bf16.mxu0 0
  %226 = vmatpush1.bf16.msra.mxu0 %v207
  %227 = vmatprep.subr.bf16.mxu0 0
  %228 = vmatpush1.bf16.msra.mxu0 %v208
  %229 = vmatprep.subr.bf16.mxu0 0
  %230 = vmatpush1.bf16.msra.mxu0 %v209
  %231 = vmatprep.subr.bf16.mxu0 0
  %232 = vmatpush1.bf16.msra.mxu0 %v210
  %233 = vmatprep.subr.bf16.mxu0 0
  %234 = vmatpush1.bf16.msra.mxu0 %v211
  %235 = vmatprep.subr.bf16.mxu0 0
  %236 = vmatpush1.bf16.msra.mxu0 %v212
  %237 = vmatprep.subr.bf16.mxu0 0
  %238 = vmatpush1.bf16.msra.mxu0 0
  %239 = vmatprep.subr.bf16.mxu0 0
  %240 = vmatpush1.bf16.msra.mxu0 0
  %241 = vmatprep.subr.bf16.mxu0 0
  %242 = vmatpush1.bf16.msra.mxu0 0
  %243 = vmatprep.subr.bf16.mxu0 0
  %244 = vmatpush1.bf16.msra.mxu0 0
  %245 = vmatprep.subr.bf16.mxu0 0
  %246 = vmatpush1.bf16.msra.mxu0 0
  %247 = vmatprep.subr.bf16.mxu0 0
  %248 = vmatpush1.bf16.msra.mxu0 0
  %249 = vmatprep.subr.bf16.mxu0 0
  %250 = vmatpush1.bf16.msra.mxu0 0
  %251 = vmatprep.subr.bf16.mxu0 0
  %252 = vmatpush1.bf16.msra.mxu0 0
  %253 = vmatprep.mubr.bf16.mxu0 0
  %254 = vmatmul.mubr.bf16.gmra.mrb[0].mxu0 %v149
  %v255 = vpop.f32.mrb[0].mxu0
  %v256 = vadd.f32 %v171, %v255
  %v257 = vpop.f32.mrb[0].mxu0
  %v258 = vpop.f32.mrb[0].mxu0
  %v259 = vadd.f32 %v171, %v258
  %v260 = vpop.f32.mrb[0].mxu0
  %261 = vdwg.mxu0
  %v262 = vmax.f32 %v256, 0.0
  %v263 = vmax.f32 %v259, 0.0
  %v264 = vpack.c.bf16 %v263, %v262
  %v265 = vld [vmem:[%s5] sm:$0xf]
  %v266 = vld [vmem:[%s5 + $0x4] sm:$0xf]
  %v267 = vld [vmem:[%s5 + $0x8] sm:$0xf]
  %v268 = vld [vmem:[%s5 + $0xc] sm:$0xf]
  %v269 = vld [vmem:[%s5 + $0x10] sm:$0xf]
  %v270 = vld [vmem:[%s5 + $0x14] sm:$0xf]
  %v271 = vld [vmem:[%s5 + $0x18] sm:$0xf]
  %v272 = vld [vmem:[%s5 + $0x1c] sm:$0xf]
  %v273 = vld [vmem:[%s5 + $0x20] sm:$0xf]
  %v274 = vld [vmem:[%s5 + $0x24] sm:$0xf]
  %v275 = vld [vmem:[%s5 + $0x28] sm:$0xf]
  %v276 = vld [vmem:[%s5 + $0x2c] sm:$0xf]
  %v277 = vld [vmem:[%s5 + $0x30] sm:$0xf]
  %v278 = vld [vmem:[%s5 + $0x34] sm:$0xf]
  %v279 = vld [vmem:[%s5 + $0x38] sm:$0xf]
  %v280 = vld [vmem:[%s5 + $0x3c] sm:$0xf]
  %v281 = vld [vmem:[%s6] sm:$0x1]
  %v283 = vlaneseq
  %v284 = vshrl.u32 %v283, 7
  %v285 = vsub.s32 0, %v284
  %v286 = vrot.slane %v281, %v285
  %v304 = vunpack.c.l.b16 %v265
  %v305 = vunpack.c.l.b16 %v266
  %v306 = vunpack.c.l.b16 %v267
  %v307 = vunpack.c.l.b16 %v268
  %v308 = vunpack.c.l.b16 %v269
  %v309 = vunpack.c.l.b16 %v270
  %v310 = vunpack.c.l.b16 %v271
  %v311 = vunpack.c.l.b16 %v272
  %v312 = vunpack.c.l.b16 %v273
  %v313 = vunpack.c.l.b16 %v274
  %v314 = vunpack.c.l.b16 %v275
  %v315 = vunpack.c.l.b16 %v276
  %v316 = vunpack.c.l.b16 %v277
  %v317 = vunpack.c.l.b16 %v278
  %v318 = vunpack.c.l.b16 %v279
  %v319 = vunpack.c.l.b16 %v280
  %v320 = vpack.c.b16 %v305, %v304
  %v321 = vpack.c.b16 %v307, %v306
  %v322 = vpack.c.b16 %v309, %v308
  %v323 = vpack.c.b16 %v311, %v310
  %v324 = vpack.c.b16 %v313, %v312
  %v325 = vpack.c.b16 %v315, %v314
  %v326 = vpack.c.b16 %v317, %v316
  %v327 = vpack.c.b16 %v319, %v318
  %336 = vmatprep.subr.bf16.mxu0 0
  %337 = vmatpush1.bf16.msra.mxu0 %v320
  %338 = vmatprep.subr.bf16.mxu0 0
  %339 = vmatpush1.bf16.msra.mxu0 %v321
  %340 = vmatprep.subr.bf16.mxu0 0
  %341 = vmatpush1.bf16.msra.mxu0 %v322
  %342 = vmatprep.subr.bf16.mxu0 0
  %343 = vmatpush1.bf16.msra.mxu0 %v323
  %344 = vmatprep.subr.bf16.mxu0 0
  %345 = vmatpush1.bf16.msra.mxu0 %v324
  %346 = vmatprep.subr.bf16.mxu0 0
  %347 = vmatpush1.bf16.msra.mxu0 %v325
  %348 = vmatprep.subr.bf16.mxu0 0
  %349 = vmatpush1.bf16.msra.mxu0 %v326
  %350 = vmatprep.subr.bf16.mxu0 0
  %351 = vmatpush1.bf16.msra.mxu0 %v327
  %352 = vmatprep.subr.bf16.mxu0 0
  %353 = vmatpush1.bf16.msra.mxu0 0
  %354 = vmatprep.subr.bf16.mxu0 0
  %355 = vmatpush1.bf16.msra.mxu0 0
  %356 = vmatprep.subr.bf16.mxu0 0
  %357 = vmatpush1.bf16.msra.mxu0 0
  %358 = vmatprep.subr.bf16.mxu0 0
  %359 = vmatpush1.bf16.msra.mxu0 0
  %360 = vmatprep.subr.bf16.mxu0 0
  %361 = vmatpush1.bf16.msra.mxu0 0
  %362 = vmatprep.subr.bf16.mxu0 0
  %363 = vmatpush1.bf16.msra.mxu0 0
  %364 = vmatprep.subr.bf16.mxu0 0
  %365 = vmatpush1.bf16.msra.mxu0 0
  %366 = vmatprep.subr.bf16.mxu0 0
  %367 = vmatpush1.bf16.msra.mxu0 0
  %368 = vmatprep.mubr.bf16.mxu0 0
  %369 = vmatmul.mubr.bf16.gmra.mrb[0].mxu0 %v264
  %v370 = vpop.f32.mrb[0].mxu0
  %v371 = vadd.f32 %v286, %v370
  %v372 = vpop.f32.mrb[0].mxu0
  %v373 = vpop.f32.mrb[0].mxu0
  %v374 = vadd.f32 %v286, %v373
  %v375 = vpop.f32.mrb[0].mxu0
  %376 = vdwg.mxu0
  %377 = vst [vmem:[%s7] sm:$0xff] %v371
  %378 = vst [vmem:[%s7 + $0x8] sm:$0xff] %v374
  // Predicated region
  $region30: #{net_forward.1} parent=0 // pred_check
    _
  $region31: #{net_forward.1} parent=0 // pred_check_branch
    %380 = sbr.rel (0) target = $region33
  $region32: #{net_forward.1} parent=0 // pred_region
    _
  $region33: #{net_forward.1} parent=0 // pred_fallthru
    _
  // Predicated region
  $region34: #{net_forward.1} parent=0 // pred_check
    _
  $region35: #{net_forward.1} parent=0 // pred_check_branch
    %382 = sbr.rel (0) target = $region37
  $region36: #{net_forward.1} parent=0 // pred_region
    _
  $region37: #{net_forward.1} parent=0 // pred_fallthru
    _

</llo_original>
